<compile_context>
chip_gen: v5e
topology: v5e:2x2
jax: 0.10.0
libtpu: 0.0.40
codegen_flags: <defaults>
</compile_context>

<pallas_src>
import jax
import jax.numpy as jnp
from jax.experimental import pallas as pl
from jax.experimental.pallas import tpu as pltpu

LANE = 128          # TPU lane width (last-dim tile)
BF16_SUBLANE = 16   # sublane packing for bf16 (second-to-last dim tile)
HID1, HID2 = 32, 64


def _round_up(x, m):
    return ((x + m - 1) // m) * m


def mlp_kernel(x_ref, w1_ref, b1_ref, w2_ref, b2_ref, w3_ref, b3_ref, o_ref):
    # Layer 1: Linear(n_states -> 32) + ReLU   (bf16 MXU matmul, f32 accumulate)
    h1 = jnp.dot(x_ref[...], w1_ref[...], preferred_element_type=jnp.float32)
    h1 = jnp.maximum(h1 + b1_ref[...], 0.0)
    # Layer 2: Linear(32 -> 64) + ReLU
    h2 = jnp.dot(h1.astype(jnp.bfloat16), w2_ref[...],
                 preferred_element_type=jnp.float32)
    h2 = jnp.maximum(h2 + b2_ref[...], 0.0)
    # Output layer: Linear(64 -> n_actions), no activation.
    out = jnp.dot(h2.astype(jnp.bfloat16), w3_ref[...],
                  preferred_element_type=jnp.float32)
    o_ref[...] = (out + b3_ref[...]).astype(o_ref.dtype)


def net_forward(x, params, *, tile_m=4096):
    """x: [batch, n_states] float32. params: padded params from init_params.
    Returns [batch, n_actions] float32."""
    w1, b1 = params["w1"], params["b1"]
    w2, b2 = params["w2"], params["b2"]
    w3, b3 = params["w3"], params["b3"]
    n_states = params["n_states"]
    n_actions = params["n_actions"]

    in_pad, h1_pad = w1.shape
    h2_pad = w2.shape[1]
    out_pad = w3.shape[1]

    batch = x.shape[0]
    # Batch tile: multiple of 16 (bf16 sublane packing), capped at tile_m and
    # at ceil(batch/2) so the parallel grid has >=2 steps whenever possible
    # (keeps both TensorCores busy on v7x megacore).
    tile_m = max(BF16_SUBLANE, _round_up(tile_m, BF16_SUBLANE))
    tm = max(BF16_SUBLANE,
             min(tile_m, _round_up(pl.cdiv(batch, 2), BF16_SUBLANE)))
    batch_pad = _round_up(batch, tm)
    grid = (batch_pad // tm,)

    # Zero-pad x to [batch_pad, in_pad] bf16. in_pad is only 16 lanes, so this
    # wrapper copy is ~8x cheaper than the old 128-lane padded version.
    if batch_pad == batch and in_pad == n_states and x.dtype == jnp.bfloat16:
        x_p = x
    else:
        x_p = jnp.zeros((batch_pad, in_pad), jnp.bfloat16)
        x_p = x_p.at[:batch, :n_states].set(x.astype(jnp.bfloat16))

    flops = 2 * batch_pad * (in_pad * h1_pad + h1_pad * h2_pad + h2_pad * out_pad)
    bytes_accessed = (
        batch_pad * in_pad * 2                                        # x (bf16)
        + sum(int(a.size) * a.dtype.itemsize for a in (w1, b1, w2, b2, w3, b3))
        + batch_pad * out_pad * 2                                     # out (bf16)
    )

    def call(single_buffer_weights):
        # Grid-invariant operands (constant index_map) stay VMEM-resident;
        # single-buffer them -- no double-buffer VMEM / DMA bookkeeping needed.
        wkw = ({"pipeline_mode": pl.Buffered(1)} if single_buffer_weights else {})
        return pl.pallas_call(
            mlp_kernel,
            out_shape=jax.ShapeDtypeStruct((batch_pad, out_pad), jnp.bfloat16),
            grid=grid,
            in_specs=[
                pl.BlockSpec((tm, in_pad), lambda i: (i, 0)),  # x tile (pipelined)
                pl.BlockSpec((in_pad, h1_pad), lambda i: (0, 0), **wkw),
                pl.BlockSpec((1, h1_pad), lambda i: (0, 0), **wkw),
                pl.BlockSpec((h1_pad, h2_pad), lambda i: (0, 0), **wkw),
                pl.BlockSpec((1, h2_pad), lambda i: (0, 0), **wkw),
                pl.BlockSpec((h2_pad, out_pad), lambda i: (0, 0), **wkw),
                pl.BlockSpec((1, out_pad), lambda i: (0, 0), **wkw),
            ],
            out_specs=pl.BlockSpec((tm, out_pad), lambda i: (i, 0)),
            compiler_params=pltpu.CompilerParams(
                # Batch tiles are independent -> shard across TCs on v7x.
                dimension_semantics=("parallel",),
            ),
            cost_estimate=pl.CostEstimate(
                flops=flops, transcendentals=0, bytes_accessed=bytes_accessed),
        )(x_p, w1, b1, w2, b2, w3, b3)

    try:
        out = call(True)
    except Exception:
        # Fallback for JAX builds where Buffered(1) on a pallas_call BlockSpec
        # is rejected -- semantics and the big perf wins are unchanged.
        out = call(False)

    return out[:batch, :n_actions].astype(jnp.float32)


def init_params(key, n_states, n_actions):
    """PyTorch-like U(-1/sqrt(fan_in)) init. Weights stored pre-transposed
    ([in, out]) then zero-padded: the input dim only to 16 (bf16 sublane tile,
    keeps x DMA narrow), hidden/output dims to 128 lanes. Weights in bf16,
    biases in f32 (shape [1, out_pad])."""
    def linear(k, fan_in, fan_out):
        kw, kb = jax.random.split(k)
        bound = 1.0 / float(jnp.sqrt(jnp.float32(fan_in)))
        w = jax.random.uniform(kw, (fan_in, fan_out), jnp.float32, -bound, bound)
        b = jax.random.uniform(kb, (fan_out,), jnp.float32, -bound, bound)
        return w, b

    k1, k2, k3 = jax.random.split(key, 3)
    w1, b1 = linear(k1, n_states, HID1)
    w2, b2 = linear(k2, HID1, HID2)
    w3, b3 = linear(k3, HID2, n_actions)

    # Review suggested padding n_states to 8; 16 keeps w1 on a native bf16
    # (16,128) tile at negligible extra bytes -- still ~8x less x DMA than 128.
    in_pad = _round_up(max(n_states, 1), BF16_SUBLANE)
    h1_pad = _round_up(HID1, LANE)
    h2_pad = _round_up(HID2, LANE)
    out_pad = _round_up(max(n_actions, 1), LANE)

    def pad_w(w, rp, cp):
        out = jnp.zeros((rp, cp), jnp.float32)
        return out.at[: w.shape[0], : w.shape[1]].set(w)

    def pad_b(b, cp):
        out = jnp.zeros((1, cp), jnp.float32)
        return out.at[0, : b.shape[0]].set(b)

    return {
        "w1": pad_w(w1, in_pad, h1_pad).astype(jnp.bfloat16),
        "b1": pad_b(b1, h1_pad),
        "w2": pad_w(w2, h1_pad, h2_pad).astype(jnp.bfloat16),
        "b2": pad_b(b2, h2_pad),
        "w3": pad_w(w3, h2_pad, out_pad).astype(jnp.bfloat16),
        "b3": pad_b(b3, out_pad),
        "n_states": n_states,
        "n_actions": n_actions,
        # Unpadded f32 copies for the reference path.
        "_ref": {"w1": w1, "b1": b1, "w2": w2, "b2": b2, "w3": w3, "b3": b3},
    }


def net_forward_ref(x, params):
    """Pure-JAX reference (bf16-rounded weights, f32 math) for validation."""
    r = params["_ref"]
    def q(w):  # match the kernel's bf16 weight storage
        return w.astype(jnp.bfloat16).astype(jnp.float32)
    h1 = jnp.maximum(x @ q(r["w1"]) + r["b1"], 0.0)
    h2 = jnp.maximum(h1 @ q(r["w2"]) + r["b2"], 0.0)
    return h2 @ q(r["w3"]) + r["b3"]


if __name__ == "__main__":
    key = jax.random.PRNGKey(0)
    k_params, k_x, k_x2 = jax.random.split(key, 3)

    batch, n_states, n_actions = 2, 4, 2
    params = init_params(k_params, n_states, n_actions)

    # Small case (single tile).
    x = jax.random.normal(k_x, (batch, n_states), jnp.float32)
    out = jax.block_until_ready(net_forward(x, params))
    ref = net_forward_ref(x, params)
    assert out.shape == (batch, n_actions)
    assert out.dtype == jnp.float32
    assert jnp.allclose(out, ref, atol=3e-2, rtol=3e-2)

    # Multi-tile case (3 grid steps: exercises batch grid + padded tail).
    x2 = jax.random.normal(k_x2, (40, n_states), jnp.float32)
    out2 = jax.block_until_ready(net_forward(x2, params, tile_m=16))
    ref2 = net_forward_ref(x2, params)
    assert out2.shape == (40, n_actions)
    assert jnp.allclose(out2, ref2, atol=3e-2, rtol=3e-2)

    # Default tiling on the same batch (2 grid steps: v7x dual-TC path).
    out3 = jax.block_until_ready(net_forward(x2, params))
    assert out3.shape == (40, n_actions)
    assert jnp.allclose(out3, ref2, atol=3e-2, rtol=3e-2)

    print("KERNEL_OK")
</pallas_src>

<mosaic_0001>
module attributes {stable_mosaic.version = 11 : i64} {
  func.func @mlp_kernel(%arg0: i32, %arg1: memref<16x16xbf16, #tpu.memory_space<vmem>>, %arg2: memref<16x128xbf16, #tpu.memory_space<vmem>>, %arg3: memref<1x128xf32, #tpu.memory_space<vmem>>, %arg4: memref<128x128xbf16, #tpu.memory_space<vmem>>, %arg5: memref<1x128xf32, #tpu.memory_space<vmem>>, %arg6: memref<128x128xbf16, #tpu.memory_space<vmem>>, %arg7: memref<1x128xf32, #tpu.memory_space<vmem>>, %arg8: memref<16x128xbf16, #tpu.memory_space<vmem>>) attributes {dimension_semantics = [#tpu.dimension_semantics<parallel>], iteration_bounds = array<i64: 1>, scalar_prefetch = 0 : i64, scratch_operands = 0 : i64, tpu.core_type = #tpu.core_type<tc>, window_params = [{transform_indices = @transform_0, window_bounds = array<i64: 16, 16>}, {pipeline_mode = #tpu.pipeline_mode<synchronous>, transform_indices = @transform_1, window_bounds = array<i64: 16, 128>}, {pipeline_mode = #tpu.pipeline_mode<synchronous>, transform_indices = @transform_2, window_bounds = array<i64: 1, 128>}, {pipeline_mode = #tpu.pipeline_mode<synchronous>, transform_indices = @transform_3, window_bounds = array<i64: 128, 128>}, {pipeline_mode = #tpu.pipeline_mode<synchronous>, transform_indices = @transform_4, window_bounds = array<i64: 1, 128>}, {pipeline_mode = #tpu.pipeline_mode<synchronous>, transform_indices = @transform_5, window_bounds = array<i64: 128, 128>}, {pipeline_mode = #tpu.pipeline_mode<synchronous>, transform_indices = @transform_6, window_bounds = array<i64: 1, 128>}, {transform_indices = @transform_7, window_bounds = array<i64: 16, 128>}]} {
    %c0 = arith.constant 0 : index
    %c0_0 = arith.constant 0 : index
    %0 = vector.load %arg1[%c0, %c0_0] : memref<16x16xbf16, #tpu.memory_space<vmem>>, vector<16x16xbf16>
    %c0_1 = arith.constant 0 : index
    %c0_2 = arith.constant 0 : index
    %1 = vector.load %arg2[%c0_1, %c0_2] : memref<16x128xbf16, #tpu.memory_space<vmem>>, vector<16x128xbf16>
    %cst = arith.constant dense<0.000000e+00> : vector<16x128xf32>
    %2 = tpu.matmul %0, %1, %cst {dimension_numbers = #tpu.dot_dimension_numbers<[1], [0], [0], [1], [0, 0, 1, 1], [], []>} : vector<16x16xbf16>, vector<16x128xbf16>, vector<16x128xf32> -> vector<16x128xf32>
    %c0_3 = arith.constant 0 : index
    %c0_4 = arith.constant 0 : index
    %3 = vector.load %arg3[%c0_3, %c0_4] : memref<1x128xf32, #tpu.memory_space<vmem>>, vector<1x128xf32>
    %4 = vector.broadcast %3 : vector<1x128xf32> to vector<16x128xf32>
    %5 = arith.addf %2, %4 : vector<16x128xf32>
    %cst_5 = arith.constant 0.000000e+00 : f32
    %6 = vector.broadcast %cst_5 : f32 to vector<16x128xf32>
    %7 = arith.maximumf %5, %6 : vector<16x128xf32>
    %8 = arith.truncf %7 : vector<16x128xf32> to vector<16x128xbf16>
    %c0_6 = arith.constant 0 : index
    %c0_7 = arith.constant 0 : index
    %9 = vector.load %arg4[%c0_6, %c0_7] : memref<128x128xbf16, #tpu.memory_space<vmem>>, vector<128x128xbf16>
    %cst_8 = arith.constant dense<0.000000e+00> : vector<16x128xf32>
    %10 = tpu.matmul %8, %9, %cst_8 {dimension_numbers = #tpu.dot_dimension_numbers<[1], [0], [0], [1], [0, 0, 1, 1], [], []>} : vector<16x128xbf16>, vector<128x128xbf16>, vector<16x128xf32> -> vector<16x128xf32>
    %c0_9 = arith.constant 0 : index
    %c0_10 = arith.constant 0 : index
    %11 = vector.load %arg5[%c0_9, %c0_10] : memref<1x128xf32, #tpu.memory_space<vmem>>, vector<1x128xf32>
    %12 = vector.broadcast %11 : vector<1x128xf32> to vector<16x128xf32>
    %13 = arith.addf %10, %12 : vector<16x128xf32>
    %cst_11 = arith.constant 0.000000e+00 : f32
    %14 = vector.broadcast %cst_11 : f32 to vector<16x128xf32>
    %15 = arith.maximumf %13, %14 : vector<16x128xf32>
    %16 = arith.truncf %15 : vector<16x128xf32> to vector<16x128xbf16>
    %c0_12 = arith.constant 0 : index
    %c0_13 = arith.constant 0 : index
    %17 = vector.load %arg6[%c0_12, %c0_13] : memref<128x128xbf16, #tpu.memory_space<vmem>>, vector<128x128xbf16>
    %cst_14 = arith.constant dense<0.000000e+00> : vector<16x128xf32>
    %18 = tpu.matmul %16, %17, %cst_14 {dimension_numbers = #tpu.dot_dimension_numbers<[1], [0], [0], [1], [0, 0, 1, 1], [], []>} : vector<16x128xbf16>, vector<128x128xbf16>, vector<16x128xf32> -> vector<16x128xf32>
    %c0_15 = arith.constant 0 : index
    %c0_16 = arith.constant 0 : index
    %19 = vector.load %arg7[%c0_15, %c0_16] : memref<1x128xf32, #tpu.memory_space<vmem>>, vector<1x128xf32>
    %20 = vector.broadcast %19 : vector<1x128xf32> to vector<16x128xf32>
    %21 = arith.addf %18, %20 : vector<16x128xf32>
    %22 = arith.truncf %21 : vector<16x128xf32> to vector<16x128xbf16>
    %c0_17 = arith.constant 0 : index
    %c0_18 = arith.constant 0 : index
    %23 = vector.load %arg8[%c0_17, %c0_18] : memref<16x128xbf16, #tpu.memory_space<vmem>>, vector<16x128xbf16>
    tpu.vector_store %arg8[%c0_17, %c0_18], %22 {strides = array<i32>} : memref<16x128xbf16, #tpu.memory_space<vmem>>, vector<16x128xbf16>,
    return
  }
  func.func @transform_0(%arg0: i32) -> (i32, i32) {
    %c0_i32 = arith.constant 0 : i32
    %c0_i32_0 = arith.constant 0 : i32
    return %arg0, %c0_i32 : i32, i32
  }
  func.func @transform_1(%arg0: i32) -> (i32, i32) {
    %c0_i32 = arith.constant 0 : i32
    %c0_i32_0 = arith.constant 0 : i32
    %c0_i32_1 = arith.constant 0 : i32
    return %c0_i32, %c0_i32_0 : i32, i32
  }
  func.func @transform_2(%arg0: i32) -> (i32, i32) {
    %c0_i32 = arith.constant 0 : i32
    %c0_i32_0 = arith.constant 0 : i32
    %c0_i32_1 = arith.constant 0 : i32
    return %c0_i32, %c0_i32_0 : i32, i32
  }
  func.func @transform_3(%arg0: i32) -> (i32, i32) {
    %c0_i32 = arith.constant 0 : i32
    %c0_i32_0 = arith.constant 0 : i32
    %c0_i32_1 = arith.constant 0 : i32
    return %c0_i32, %c0_i32_0 : i32, i32
  }
  func.func @transform_4(%arg0: i32) -> (i32, i32) {
    %c0_i32 = arith.constant 0 : i32
    %c0_i32_0 = arith.constant 0 : i32
    %c0_i32_1 = arith.constant 0 : i32
    return %c0_i32, %c0_i32_0 : i32, i32
  }
  func.func @transform_5(%arg0: i32) -> (i32, i32) {
    %c0_i32 = arith.constant 0 : i32
    %c0_i32_0 = arith.constant 0 : i32
    %c0_i32_1 = arith.constant 0 : i32
    return %c0_i32, %c0_i32_0 : i32, i32
  }
  func.func @transform_6(%arg0: i32) -> (i32, i32) {
    %c0_i32 = arith.constant 0 : i32
    %c0_i32_0 = arith.constant 0 : i32
    %c0_i32_1 = arith.constant 0 : i32
    return %c0_i32, %c0_i32_0 : i32, i32
  }
  func.func @transform_7(%arg0: i32) -> (i32, i32) {
    %c0_i32 = arith.constant 0 : i32
    %c0_i32_0 = arith.constant 0 : i32
    return %arg0, %c0_i32 : i32, i32
  }
}

module attributes {stable_mosaic.version = 11 : i64} {
  func.func @mlp_kernel(%arg0: i32, %arg1: memref<16x16xbf16, #tpu.memory_space<vmem>>, %arg2: memref<16x128xbf16, #tpu.memory_space<vmem>>, %arg3: memref<1x128xf32, #tpu.memory_space<vmem>>, %arg4: memref<128x128xbf16, #tpu.memory_space<vmem>>, %arg5: memref<1x128xf32, #tpu.memory_space<vmem>>, %arg6: memref<128x128xbf16, #tpu.memory_space<vmem>>, %arg7: memref<1x128xf32, #tpu.memory_space<vmem>>, %arg8: memref<16x128xbf16, #tpu.memory_space<vmem>>) attributes {dimension_semantics = [#tpu.dimension_semantics<parallel>], iteration_bounds = array<i64: 1>, scalar_prefetch = 0 : i64, scratch_operands = 0 : i64, tpu.core_type = #tpu.core_type<tc>, window_params = [{transform_indices = @transform_0, window_bounds = array<i64: 16, 16>}, {pipeline_mode = #tpu.pipeline_mode<synchronous>, transform_indices = @transform_1, window_bounds = array<i64: 16, 128>}, {pipeline_mode = #tpu.pipeline_mode<synchronous>, transform_indices = @transform_2, window_bounds = array<i64: 1, 128>}, {pipeline_mode = #tpu.pipeline_mode<synchronous>, transform_indices = @transform_3, window_bounds = array<i64: 128, 128>}, {pipeline_mode = #tpu.pipeline_mode<synchronous>, transform_indices = @transform_4, window_bounds = array<i64: 1, 128>}, {pipeline_mode = #tpu.pipeline_mode<synchronous>, transform_indices = @transform_5, window_bounds = array<i64: 128, 128>}, {pipeline_mode = #tpu.pipeline_mode<synchronous>, transform_indices = @transform_6, window_bounds = array<i64: 1, 128>}, {transform_indices = @transform_7, window_bounds = array<i64: 16, 128>}]} {
    %c0 = arith.constant 0 : index
    %c0_0 = arith.constant 0 : index
    %0 = vector.load %arg1[%c0, %c0_0] : memref<16x16xbf16, #tpu.memory_space<vmem>>, vector<16x16xbf16>
    %c0_1 = arith.constant 0 : index
    %c0_2 = arith.constant 0 : index
    %1 = vector.load %arg2[%c0_1, %c0_2] : memref<16x128xbf16, #tpu.memory_space<vmem>>, vector<16x128xbf16>
    %cst = arith.constant dense<0.000000e+00> : vector<16x128xf32>
    %2 = tpu.matmul %0, %1, %cst {dimension_numbers = #tpu.dot_dimension_numbers<[1], [0], [0], [1], [0, 0, 1, 1], [], []>} : vector<16x16xbf16>, vector<16x128xbf16>, vector<16x128xf32> -> vector<16x128xf32>
    %c0_3 = arith.constant 0 : index
    %c0_4 = arith.constant 0 : index
    %3 = vector.load %arg3[%c0_3, %c0_4] : memref<1x128xf32, #tpu.memory_space<vmem>>, vector<1x128xf32>
    %4 = vector.broadcast %3 : vector<1x128xf32> to vector<16x128xf32>
    %5 = arith.addf %2, %4 : vector<16x128xf32>
    %cst_5 = arith.constant 0.000000e+00 : f32
    %6 = vector.broadcast %cst_5 : f32 to vector<16x128xf32>
    %7 = arith.maximumf %5, %6 : vector<16x128xf32>
    %8 = arith.truncf %7 : vector<16x128xf32> to vector<16x128xbf16>
    %c0_6 = arith.constant 0 : index
    %c0_7 = arith.constant 0 : index
    %9 = vector.load %arg4[%c0_6, %c0_7] : memref<128x128xbf16, #tpu.memory_space<vmem>>, vector<128x128xbf16>
    %cst_8 = arith.constant dense<0.000000e+00> : vector<16x128xf32>
    %10 = tpu.matmul %8, %9, %cst_8 {dimension_numbers = #tpu.dot_dimension_numbers<[1], [0], [0], [1], [0, 0, 1, 1], [], []>} : vector<16x128xbf16>, vector<128x128xbf16>, vector<16x128xf32> -> vector<16x128xf32>
    %c0_9 = arith.constant 0 : index
    %c0_10 = arith.constant 0 : index
    %11 = vector.load %arg5[%c0_9, %c0_10] : memref<1x128xf32, #tpu.memory_space<vmem>>, vector<1x128xf32>
    %12 = vector.broadcast %11 : vector<1x128xf32> to vector<16x128xf32>
    %13 = arith.addf %10, %12 : vector<16x128xf32>
    %cst_11 = arith.constant 0.000000e+00 : f32
    %14 = vector.broadcast %cst_11 : f32 to vector<16x128xf32>
    %15 = arith.maximumf %13, %14 : vector<16x128xf32>
    %16 = arith.truncf %15 : vector<16x128xf32> to vector<16x128xbf16>
    %c0_12 = arith.constant 0 : index
    %c0_13 = arith.constant 0 : index
    %17 = vector.load %arg6[%c0_12, %c0_13] : memref<128x128xbf16, #tpu.memory_space<vmem>>, vector<128x128xbf16>
    %cst_14 = arith.constant dense<0.000000e+00> : vector<16x128xf32>
    %18 = tpu.matmul %16, %17, %cst_14 {dimension_numbers = #tpu.dot_dimension_numbers<[1], [0], [0], [1], [0, 0, 1, 1], [], []>} : vector<16x128xbf16>, vector<128x128xbf16>, vector<16x128xf32> -> vector<16x128xf32>
    %c0_15 = arith.constant 0 : index
    %c0_16 = arith.constant 0 : index
    %19 = vector.load %arg7[%c0_15, %c0_16] : memref<1x128xf32, #tpu.memory_space<vmem>>, vector<1x128xf32>
    %20 = vector.broadcast %19 : vector<1x128xf32> to vector<16x128xf32>
    %21 = arith.addf %18, %20 : vector<16x128xf32>
    %22 = arith.truncf %21 : vector<16x128xf32> to vector<16x128xbf16>
    %c0_17 = arith.constant 0 : index
    %c0_18 = arith.constant 0 : index
    %23 = vector.load %arg8[%c0_17, %c0_18] : memref<16x128xbf16, #tpu.memory_space<vmem>>, vector<16x128xbf16>
    tpu.vector_store %arg8[%c0_17, %c0_18], %22 {strides = array<i32>} : memref<16x128xbf16, #tpu.memory_space<vmem>>, vector<16x128xbf16>,
    return
  }
  func.func @transform_0(%arg0: i32) -> (i32, i32) {
    %c0_i32 = arith.constant 0 : i32
    %c0_i32_0 = arith.constant 0 : i32
    return %arg0, %c0_i32 : i32, i32
  }
  func.func @transform_1(%arg0: i32) -> (i32, i32) {
    %c0_i32 = arith.constant 0 : i32
    %c0_i32_0 = arith.constant 0 : i32
    %c0_i32_1 = arith.constant 0 : i32
    return %c0_i32, %c0_i32_0 : i32, i32
  }
  func.func @transform_2(%arg0: i32) -> (i32, i32) {
    %c0_i32 = arith.constant 0 : i32
    %c0_i32_0 = arith.constant 0 : i32
    %c0_i32_1 = arith.constant 0 : i32
    return %c0_i32, %c0_i32_0 : i32, i32
  }
  func.func @transform_3(%arg0: i32) -> (i32, i32) {
    %c0_i32 = arith.constant 0 : i32
    %c0_i32_0 = arith.constant 0 : i32
    %c0_i32_1 = arith.constant 0 : i32
    return %c0_i32, %c0_i32_0 : i32, i32
  }
  func.func @transform_4(%arg0: i32) -> (i32, i32) {
    %c0_i32 = arith.constant 0 : i32
    %c0_i32_0 = arith.constant 0 : i32
    %c0_i32_1 = arith.constant 0 : i32
    return %c0_i32, %c0_i32_0 : i32, i32
  }
  func.func @transform_5(%arg0: i32) -> (i32, i32) {
    %c0_i32 = arith.constant 0 : i32
    %c0_i32_0 = arith.constant 0 : i32
    %c0_i32_1 = arith.constant 0 : i32
    return %c0_i32, %c0_i32_0 : i32, i32
  }
  func.func @transform_6(%arg0: i32) -> (i32, i32) {
    %c0_i32 = arith.constant 0 : i32
    %c0_i32_0 = arith.constant 0 : i32
    %c0_i32_1 = arith.constant 0 : i32
    return %c0_i32, %c0_i32_0 : i32, i32
  }
  func.func @transform_7(%arg0: i32) -> (i32, i32) {
    %c0_i32 = arith.constant 0 : i32
    %c0_i32_0 = arith.constant 0 : i32
    return %arg0, %c0_i32 : i32, i32
  }
}

</mosaic_0001>

<llo_original>
// kernel: tpu_custom_call.1
$region0: #{tpu_custom_call.1}
  #allocation0 [shape = 'u32[]', space=smem, size = 0x4, offset = 0x4, fixed_abs, tag = 'smem constant byte address 0x4 - core index']
  #allocation1 [shape = 'u32[72,128]{1,0:T(1,128)}', space=vmem, size = 0x9000, scoped, tag = 'internal scratch']
  %s0 = inlined_call_operand.hbm [shape: bf16[16,16], index: 0, kind: input, shape index: {}]
  %s1 = inlined_call_operand.hbm [shape: bf16[16,128], index: 1, kind: input, shape index: {}]
  %s2 = inlined_call_operand.vmem [shape: f32[1,128], index: 2, kind: input, shape index: {}]
  %s3 = inlined_call_operand.hbm [shape: bf16[128,128], index: 3, kind: input, shape index: {}]
  %s4 = inlined_call_operand.vmem [shape: f32[1,128], index: 4, kind: input, shape index: {}]
  %s5 = inlined_call_operand.hbm [shape: bf16[128,128], index: 5, kind: input, shape index: {}]
  %s6 = inlined_call_operand.vmem [shape: f32[1,128], index: 6, kind: input, shape index: {}]
  %s7 = inlined_call_operand.hbm [shape: bf16[16,128], index: 7, kind: output, shape index: {}]
  %s8 = sld [smem:[#allocation0]]
  $region54: #{tpu_custom_call.1} parent=0
    _
  %s10 = ssub.s32 1, %s8
  %s11 = scalar_select 0, %s10, %s8
  $region1: #{tpu_custom_call.1} parent=0
    #allocation2 [shape = 'u8[4096]{0}', space=vmem, size = 0x1000, scoped, tag = 'input window, operand 0, single buffered']
    #allocation3 [shape = 's32[1]{0}', space=sflag, size = 0x4, scoped, tag = 'scoped memory for tpu_custom_call.1']
    #allocation4 [shape = 's32[1]{0}', space=sflag, size = 0x4, scoped, tag = 'scoped memory for tpu_custom_call.1']
    #allocation5 [shape = 'u8[4096]{0}', space=vmem, size = 0x1000, scoped, tag = 'input window, operand 1, single buffered']
    #allocation6 [shape = 's32[1]{0}', space=sflag, size = 0x4, scoped, tag = 'scoped memory for tpu_custom_call.1']
    #allocation7 [shape = 'u8[32768]{0}', space=vmem, size = 0x8000, scoped, tag = 'input window, operand 3, single buffered']
    #allocation8 [shape = 'u8[32768]{0}', space=vmem, size = 0x8000, scoped, tag = 'input window, operand 5, single buffered']
    #allocation9 [shape = 's32[1]{0}', space=sflag, size = 0x4, scoped, tag = 'scoped memory for tpu_custom_call.1']
    #allocation10 [shape = 'u8[4096]{0}', space=vmem, size = 0x1000, scoped, tag = 'output window, operand 0, single buffered']
    %12 = vsyncpa [#allocation3], 0
    %13 = vsyncpa [#allocation6], 0
    %14 = vsyncpa [#allocation9], 0
    %15 = vsyncpa [#allocation4], 0
    // Predicated region
    $region2: #{tpu_custom_call.1} parent=1 // pred_check
      _
    $region3: #{tpu_custom_call.1} parent=1 // pred_check_branch
      %17 = sbr.rel (0) target = $region5
    $region4: #{tpu_custom_call.1} parent=1 // pred_region
      %19 = vsyncadd [#allocation3], 0
      %s20 = sshll.u32 %s0, 4
      %s21 = int_to_ptr.hbm [resolvable:$true] %s20
      %s22 = sshll.u32 [#allocation2], 4
      %s23 = int_to_ptr.vmem [resolvable:$true] %s22
      %28 = dma.hbm_to_vmem [thread:$0]  %s21, 128, %s23, [#allocation3], 64, 64, 4
    $region5: #{tpu_custom_call.1} parent=1 // pred_fallthru
      _
    // Predicated region
    $region6: #{tpu_custom_call.1} parent=1 // pred_check
      _
    $region7: #{tpu_custom_call.1} parent=1 // pred_check_branch
      %30 = sbr.rel (0) target = $region9
    $region8: #{tpu_custom_call.1} parent=1 // pred_region
      %32 = vsyncadd [#allocation6], 0
      %s33 = sshll.u32 %s1, 4
      %s34 = int_to_ptr.hbm [resolvable:$true] %s33
      %s35 = sshll.u32 [#allocation5], 4
      %s36 = int_to_ptr.vmem [resolvable:$true] %s35
      %41 = dma.hbm_to_vmem [thread:$0]  %s34, 128, %s36, [#allocation6], 64, 64, 4
    $region9: #{tpu_custom_call.1} parent=1 // pred_fallthru
      _
    // Predicated region
    $region10: #{tpu_custom_call.1} parent=1 // pred_check
      _
    $region11: #{tpu_custom_call.1} parent=1 // pred_check_branch
      %43 = sbr.rel (0) target = $region13
    $region12: #{tpu_custom_call.1} parent=1 // pred_region
      _
    $region13: #{tpu_custom_call.1} parent=1 // pred_fallthru
      _
    // Predicated region
    $region14: #{tpu_custom_call.1} parent=1 // pred_check
      _
    $region15: #{tpu_custom_call.1} parent=1 // pred_check_branch
      %45 = sbr.rel (0) target = $region17
    $region16: #{tpu_custom_call.1} parent=1 // pred_region
      %47 = vsyncadd [#allocation6], 0
      %s48 = sshll.u32 %s3, 4
      %s49 = int_to_ptr.hbm [resolvable:$true] %s48
      %s50 = sshll.u32 [#allocation7], 4
      %s51 = int_to_ptr.vmem [resolvable:$true] %s50
      %56 = dma.hbm_to_vmem [thread:$0]  %s49, 1024, %s51, [#allocation6], 64, 64, 4
    $region17: #{tpu_custom_call.1} parent=1 // pred_fallthru
      _
    // Predicated region
    $region18: #{tpu_custom_call.1} parent=1 // pred_check
      _
    $region19: #{tpu_custom_call.1} parent=1 // pred_check_branch
      %58 = sbr.rel (0) target = $region21
    $region20: #{tpu_custom_call.1} parent=1 // pred_region
      _
    $region21: #{tpu_custom_call.1} parent=1 // pred_fallthru
      _
    // Predicated region
    $region22: #{tpu_custom_call.1} parent=1 // pred_check
      _
    $region23: #{tpu_custom_call.1} parent=1 // pred_check_branch
      %60 = sbr.rel (0) target = $region25
    $region24: #{tpu_custom_call.1} parent=1 // pred_region
      %62 = vsyncadd [#allocation9], 0
      %s63 = sshll.u32 %s5, 4
      %s64 = int_to_ptr.hbm [resolvable:$true] %s63
      %s65 = sshll.u32 [#allocation8], 4
      %s66 = int_to_ptr.vmem [resolvable:$true] %s65
      %71 = dma.hbm_to_vmem [thread:$0]  %s64, 1024, %s66, [#allocation9], 64, 64, 4
    $region25: #{tpu_custom_call.1} parent=1 // pred_fallthru
      _
    // Predicated region
    $region26: #{tpu_custom_call.1} parent=1 // pred_check
      _
    $region27: #{tpu_custom_call.1} parent=1 // pred_check_branch
      %73 = sbr.rel (0) target = $region29
    $region28: #{tpu_custom_call.1} parent=1 // pred_region
      _
    $region29: #{tpu_custom_call.1} parent=1 // pred_fallthru
      _
    // Predicated region
    $region30: #{tpu_custom_call.1} parent=1 // pred_check
      _
    $region31: #{tpu_custom_call.1} parent=1 // pred_check_branch
      %75 = sbr.rel (0) target = $region33
    $region32: #{tpu_custom_call.1} parent=1 // pred_region
      %77 = dma.done [#allocation3], 128
    $region33: #{tpu_custom_call.1} parent=1 // pred_fallthru
      _
    // Predicated region
    $region34: #{tpu_custom_call.1} parent=1 // pred_check
      _
    $region35: #{tpu_custom_call.1} parent=1 // pred_check_branch
      %79 = sbr.rel (0) target = $region37
    $region36: #{tpu_custom_call.1} parent=1 // pred_region
      %81 = dma.done [#allocation6], 128
    $region37: #{tpu_custom_call.1} parent=1 // pred_fallthru
      _
    // Predicated region
    $region38: #{tpu_custom_call.1} parent=1 // pred_check
      _
    $region39: #{tpu_custom_call.1} parent=1 // pred_check_branch
      %83 = sbr.rel (0) target = $region41
    $region40: #{tpu_custom_call.1} parent=1 // pred_region
      %85 = dma.done [#allocation6], 1024
    $region41: #{tpu_custom_call.1} parent=1 // pred_fallthru
      _
    // Predicated region
    $region42: #{tpu_custom_call.1} parent=1 // pred_check
      _
    $region43: #{tpu_custom_call.1} parent=1 // pred_check_branch
      %87 = sbr.rel (0) target = $region45
    $region44: #{tpu_custom_call.1} parent=1 // pred_region
      %89 = dma.done [#allocation9], 1024
    $region45: #{tpu_custom_call.1} parent=1 // pred_fallthru
      _
    %v91 = vld [vmem:[#allocation2] sm:$0xf]
    %v92 = vld [vmem:[#allocation2 + $0x4] sm:$0xf]
    %v93 = vld [vmem:[#allocation5] sm:$0xf]
    %v94 = vld [vmem:[#allocation5 + $0x4] sm:$0xf]
    %v95 = vld [vmem:[%s2] sm:$0x1]
    %v97 = vperm.slane %v95, 0
    %v101 = vunpack.c.l.b16 %v91
    %v102 = vunpack.c.l.b16 %v92
    %v103 = vpack.c.b16 %v102, %v101
    %v106 = vunpack.c.l.b16 %v93
    %v107 = vunpack.c.l.b16 %v94
    %v108 = vpack.c.b16 %v107, %v106
    %vm110 = vcmask 130048
    %v112 = vsel %vm110, %v103, 0
    %114 = vmatpush.bf16.msra.mxu0 0
    %115 = vmatpush.bf16.msra.mxu0 0
    %116 = vmatpush.bf16.msra.mxu0 0
    %117 = vmatpush.bf16.msra.mxu0 0
    %118 = vmatpush.bf16.msra.mxu0 0
    %119 = vmatpush.bf16.msra.mxu0 0
    %120 = vmatpush.bf16.msra.mxu0 0
    %121 = vmatpush.bf16.msra.mxu0 %v108
    %122 = vmatmul.bf16.gmra.mxu0 %v112
    %v123 = vpop.f32.mrf.mxu0
    %v124 = vadd.f32 %v97, %v123
    %v125 = vpop.f32.mrf.mxu0
    %v126 = vadd.f32 %v97, %v125
    %127 = vdwg.mxu0
    %v128 = vmax.f32 %v124, 0.0
    %v129 = vmax.f32 %v126, 0.0
    %v130 = vpack.c.bf16 %v129, %v128
    %v131 = vld [vmem:[#allocation7] sm:$0xf]
    %v132 = vld [vmem:[#allocation7 + $0x4] sm:$0xf]
    %v133 = vld [vmem:[#allocation7 + $0x8] sm:$0xf]
    %v134 = vld [vmem:[#allocation7 + $0xc] sm:$0xf]
    %v135 = vld [vmem:[#allocation7 + $0x10] sm:$0xf]
    %v136 = vld [vmem:[#allocation7 + $0x14] sm:$0xf]
    %v137 = vld [vmem:[#allocation7 + $0x18] sm:$0xf]
    %v138 = vld [vmem:[#allocation7 + $0x1c] sm:$0xf]
    %v139 = vld [vmem:[#allocation7 + $0x20] sm:$0xf]
    %v140 = vld [vmem:[#allocation7 + $0x24] sm:$0xf]
    %v141 = vld [vmem:[#allocation7 + $0x28] sm:$0xf]
    %v142 = vld [vmem:[#allocation7 + $0x2c] sm:$0xf]
    %v143 = vld [vmem:[#allocation7 + $0x30] sm:$0xf]
    %v144 = vld [vmem:[#allocation7 + $0x34] sm:$0xf]
    %v145 = vld [vmem:[#allocation7 + $0x38] sm:$0xf]
    %v146 = vld [vmem:[#allocation7 + $0x3c] sm:$0xf]
    %v147 = vld [vmem:[%s4] sm:$0x1]
    %v149 = vperm.slane %v147, 0
    %v167 = vunpack.c.l.b16 %v131
    %v168 = vunpack.c.l.b16 %v132
    %v169 = vunpack.c.l.b16 %v133
    %v170 = vunpack.c.l.b16 %v134
    %v171 = vunpack.c.l.b16 %v135
    %v172 = vunpack.c.l.b16 %v136
    %v173 = vunpack.c.l.b16 %v137
    %v174 = vunpack.c.l.b16 %v138
    %v175 = vunpack.c.l.b16 %v139
    %v176 = vunpack.c.l.b16 %v140
    %v177 = vunpack.c.l.b16 %v141
    %v178 = vunpack.c.l.b16 %v142
    %v179 = vunpack.c.l.b16 %v143
    %v180 = vunpack.c.l.b16 %v144
    %v181 = vunpack.c.l.b16 %v145
    %v182 = vunpack.c.l.b16 %v146
    %v183 = vpack.c.b16 %v168, %v167
    %v184 = vpack.c.b16 %v170, %v169
    %v185 = vpack.c.b16 %v172, %v171
    %v186 = vpack.c.b16 %v174, %v173
    %v187 = vpack.c.b16 %v176, %v175
    %v188 = vpack.c.b16 %v178, %v177
    %v189 = vpack.c.b16 %v180, %v179
    %v190 = vpack.c.b16 %v182, %v181
    %199 = vmatpush.bf16.msra.mxu0 %v190
    %200 = vmatpush.bf16.msra.mxu0 %v189
    %201 = vmatpush.bf16.msra.mxu0 %v188
    %202 = vmatpush.bf16.msra.mxu0 %v187
    %203 = vmatpush.bf16.msra.mxu0 %v186
    %204 = vmatpush.bf16.msra.mxu0 %v185
    %205 = vmatpush.bf16.msra.mxu0 %v184
    %206 = vmatpush.bf16.msra.mxu0 %v183
    %207 = vmatmul.bf16.gmra.mxu0 %v130
    %v208 = vpop.f32.mrf.mxu0
    %v209 = vadd.f32 %v149, %v208
    %v210 = vpop.f32.mrf.mxu0
    %v211 = vadd.f32 %v149, %v210
    %212 = vdwg.mxu0
    %v213 = vmax.f32 %v209, 0.0
    %v214 = vmax.f32 %v211, 0.0
    %v215 = vpack.c.bf16 %v214, %v213
    %v216 = vld [vmem:[#allocation8] sm:$0xf]
    %v217 = vld [vmem:[#allocation8 + $0x4] sm:$0xf]
    %v218 = vld [vmem:[#allocation8 + $0x8] sm:$0xf]
    %v219 = vld [vmem:[#allocation8 + $0xc] sm:$0xf]
    %v220 = vld [vmem:[#allocation8 + $0x10] sm:$0xf]
    %v221 = vld [vmem:[#allocation8 + $0x14] sm:$0xf]
    %v222 = vld [vmem:[#allocation8 + $0x18] sm:$0xf]
    %v223 = vld [vmem:[#allocation8 + $0x1c] sm:$0xf]
    %v224 = vld [vmem:[#allocation8 + $0x20] sm:$0xf]
    %v225 = vld [vmem:[#allocation8 + $0x24] sm:$0xf]
    %v226 = vld [vmem:[#allocation8 + $0x28] sm:$0xf]
    %v227 = vld [vmem:[#allocation8 + $0x2c] sm:$0xf]
    %v228 = vld [vmem:[#allocation8 + $0x30] sm:$0xf]
    %v229 = vld [vmem:[#allocation8 + $0x34] sm:$0xf]
    %v230 = vld [vmem:[#allocation8 + $0x38] sm:$0xf]
    %v231 = vld [vmem:[#allocation8 + $0x3c] sm:$0xf]
    %v232 = vld [vmem:[%s6] sm:$0x1]
    %v234 = vperm.slane %v232, 0
    %v252 = vunpack.c.l.b16 %v216
    %v253 = vunpack.c.l.b16 %v217
    %v254 = vunpack.c.l.b16 %v218
    %v255 = vunpack.c.l.b16 %v219
    %v256 = vunpack.c.l.b16 %v220
    %v257 = vunpack.c.l.b16 %v221
    %v258 = vunpack.c.l.b16 %v222
    %v259 = vunpack.c.l.b16 %v223
    %v260 = vunpack.c.l.b16 %v224
    %v261 = vunpack.c.l.b16 %v225
    %v262 = vunpack.c.l.b16 %v226
    %v263 = vunpack.c.l.b16 %v227
    %v264 = vunpack.c.l.b16 %v228
    %v265 = vunpack.c.l.b16 %v229
    %v266 = vunpack.c.l.b16 %v230
    %v267 = vunpack.c.l.b16 %v231
    %v268 = vpack.c.b16 %v253, %v252
    %v269 = vpack.c.b16 %v255, %v254
    %v270 = vpack.c.b16 %v257, %v256
    %v271 = vpack.c.b16 %v259, %v258
    %v272 = vpack.c.b16 %v261, %v260
    %v273 = vpack.c.b16 %v263, %v262
    %v274 = vpack.c.b16 %v265, %v264
    %v275 = vpack.c.b16 %v267, %v266
    %284 = vmatpush.bf16.msra.mxu0 %v275
    %285 = vmatpush.bf16.msra.mxu0 %v274
    %286 = vmatpush.bf16.msra.mxu0 %v273
    %287 = vmatpush.bf16.msra.mxu0 %v272
    %288 = vmatpush.bf16.msra.mxu0 %v271
    %289 = vmatpush.bf16.msra.mxu0 %v270
    %290 = vmatpush.bf16.msra.mxu0 %v269
    %291 = vmatpush.bf16.msra.mxu0 %v268
    %292 = vmatmul.bf16.gmra.mxu0 %v215
    %v293 = vpop.f32.mrf.mxu0
    %v294 = vadd.f32 %v234, %v293
    %v295 = vpop.f32.mrf.mxu0
    %v296 = vadd.f32 %v234, %v295
    %297 = vdwg.mxu0
    %v298 = vpack.c.bf16 %v294, %v294
    %v299 = vpack.c.bf16 %v296, %v296
    %300 = vst [vmem:[#allocation10] sm:$0xf] %v298
    %301 = vst [vmem:[#allocation10 + $0x4] sm:$0xf] %v299
    // Predicated region
    $region46: #{tpu_custom_call.1} parent=1 // pred_check
      _
    $region47: #{tpu_custom_call.1} parent=1 // pred_check_branch
      %303 = sbr.rel (0) target = $region49
    $region48: #{tpu_custom_call.1} parent=1 // pred_region
      %305 = vsyncadd [#allocation4], 0
      %s306 = sshll.u32 [#allocation10], 4
      %s307 = int_to_ptr.vmem [resolvable:$true] %s306
      %s308 = sshll.u32 %s7, 4
      %s309 = int_to_ptr.hbm [resolvable:$true] %s308
      %314 = dma.vmem_to_hbm [thread:$0]  %s307, 128, %s309, [#allocation4], 64, 64, 4
    $region49: #{tpu_custom_call.1} parent=1 // pred_fallthru
      _
    // Predicated region
    $region50: #{tpu_custom_call.1} parent=1 // pred_check
      _
    $region51: #{tpu_custom_call.1} parent=1 // pred_check_branch
      %316 = sbr.rel (0) target = $region53
    $region52: #{tpu_custom_call.1} parent=1 // pred_region
      %318 = dma.done [#allocation4], 128
    $region53: #{tpu_custom_call.1} parent=1 // pred_fallthru
      _
    %319 = vsyncpa [#allocation3], 1
    %320 = vsyncpa [#allocation6], 1
    %321 = vsyncpa [#allocation9], 1
    %322 = vsyncpa [#allocation4], 1

// kernel: tpu_custom_call.1
$region0: #{tpu_custom_call.1}
  #allocation0 [shape = 'u32[]', space=smem, size = 0x4, offset = 0x4, fixed_abs, tag = 'smem constant byte address 0x4 - core index']
  #allocation1 [shape = 'u32[72,128]{1,0:T(1,128)}', space=vmem, size = 0x9000, scoped, tag = 'internal scratch']
  %s0 = inlined_call_operand.hbm [shape: bf16[16,16], index: 0, kind: input, shape index: {}]
  %s1 = inlined_call_operand.hbm [shape: bf16[16,128], index: 1, kind: input, shape index: {}]
  %s2 = inlined_call_operand.vmem [shape: f32[1,128], index: 2, kind: input, shape index: {}]
  %s3 = inlined_call_operand.hbm [shape: bf16[128,128], index: 3, kind: input, shape index: {}]
  %s4 = inlined_call_operand.vmem [shape: f32[1,128], index: 4, kind: input, shape index: {}]
  %s5 = inlined_call_operand.hbm [shape: bf16[128,128], index: 5, kind: input, shape index: {}]
  %s6 = inlined_call_operand.vmem [shape: f32[1,128], index: 6, kind: input, shape index: {}]
  %s7 = inlined_call_operand.hbm [shape: bf16[16,128], index: 7, kind: output, shape index: {}]
  %s8 = sld [smem:[#allocation0]]
  $region54: #{tpu_custom_call.1} parent=0
    _
  %s10 = ssub.s32 1, %s8
  %s11 = scalar_select 0, %s10, %s8
  $region1: #{tpu_custom_call.1} parent=0
    #allocation2 [shape = 'u8[4096]{0}', space=vmem, size = 0x1000, scoped, tag = 'input window, operand 0, single buffered']
    #allocation3 [shape = 's32[1]{0}', space=sflag, size = 0x4, scoped, tag = 'scoped memory for tpu_custom_call.1']
    #allocation4 [shape = 's32[1]{0}', space=sflag, size = 0x4, scoped, tag = 'scoped memory for tpu_custom_call.1']
    #allocation5 [shape = 'u8[4096]{0}', space=vmem, size = 0x1000, scoped, tag = 'input window, operand 1, single buffered']
    #allocation6 [shape = 's32[1]{0}', space=sflag, size = 0x4, scoped, tag = 'scoped memory for tpu_custom_call.1']
    #allocation7 [shape = 'u8[32768]{0}', space=vmem, size = 0x8000, scoped, tag = 'input window, operand 3, single buffered']
    #allocation8 [shape = 'u8[32768]{0}', space=vmem, size = 0x8000, scoped, tag = 'input window, operand 5, single buffered']
    #allocation9 [shape = 's32[1]{0}', space=sflag, size = 0x4, scoped, tag = 'scoped memory for tpu_custom_call.1']
    #allocation10 [shape = 'u8[4096]{0}', space=vmem, size = 0x1000, scoped, tag = 'output window, operand 0, single buffered']
    %12 = vsyncpa [#allocation3], 0
    %13 = vsyncpa [#allocation6], 0
    %14 = vsyncpa [#allocation9], 0
    %15 = vsyncpa [#allocation4], 0
    // Predicated region
    $region2: #{tpu_custom_call.1} parent=1 // pred_check
      _
    $region3: #{tpu_custom_call.1} parent=1 // pred_check_branch
      %17 = sbr.rel (0) target = $region5
    $region4: #{tpu_custom_call.1} parent=1 // pred_region
      %19 = vsyncadd [#allocation3], 0
      %s20 = sshll.u32 %s0, 4
      %s21 = int_to_ptr.hbm [resolvable:$true] %s20
      %s22 = sshll.u32 [#allocation2], 4
      %s23 = int_to_ptr.vmem [resolvable:$true] %s22
      %28 = dma.hbm_to_vmem [thread:$0]  %s21, 128, %s23, [#allocation3], 64, 64, 4
    $region5: #{tpu_custom_call.1} parent=1 // pred_fallthru
      _
    // Predicated region
    $region6: #{tpu_custom_call.1} parent=1 // pred_check
      _
    $region7: #{tpu_custom_call.1} parent=1 // pred_check_branch
      %30 = sbr.rel (0) target = $region9
    $region8: #{tpu_custom_call.1} parent=1 // pred_region
      %32 = vsyncadd [#allocation6], 0
      %s33 = sshll.u32 %s1, 4
      %s34 = int_to_ptr.hbm [resolvable:$true] %s33
      %s35 = sshll.u32 [#allocation5], 4
      %s36 = int_to_ptr.vmem [resolvable:$true] %s35
      %41 = dma.hbm_to_vmem [thread:$0]  %s34, 128, %s36, [#allocation6], 64, 64, 4
    $region9: #{tpu_custom_call.1} parent=1 // pred_fallthru
      _
    // Predicated region
    $region10: #{tpu_custom_call.1} parent=1 // pred_check
      _
    $region11: #{tpu_custom_call.1} parent=1 // pred_check_branch
      %43 = sbr.rel (0) target = $region13
    $region12: #{tpu_custom_call.1} parent=1 // pred_region
      _
    $region13: #{tpu_custom_call.1} parent=1 // pred_fallthru
      _
    // Predicated region
    $region14: #{tpu_custom_call.1} parent=1 // pred_check
      _
    $region15: #{tpu_custom_call.1} parent=1 // pred_check_branch
      %45 = sbr.rel (0) target = $region17
    $region16: #{tpu_custom_call.1} parent=1 // pred_region
      %47 = vsyncadd [#allocation6], 0
      %s48 = sshll.u32 %s3, 4
      %s49 = int_to_ptr.hbm [resolvable:$true] %s48
      %s50 = sshll.u32 [#allocation7], 4
      %s51 = int_to_ptr.vmem [resolvable:$true] %s50
      %56 = dma.hbm_to_vmem [thread:$0]  %s49, 1024, %s51, [#allocation6], 64, 64, 4
    $region17: #{tpu_custom_call.1} parent=1 // pred_fallthru
      _
    // Predicated region
    $region18: #{tpu_custom_call.1} parent=1 // pred_check
      _
    $region19: #{tpu_custom_call.1} parent=1 // pred_check_branch
      %58 = sbr.rel (0) target = $region21
    $region20: #{tpu_custom_call.1} parent=1 // pred_region
      _
    $region21: #{tpu_custom_call.1} parent=1 // pred_fallthru
      _
    // Predicated region
    $region22: #{tpu_custom_call.1} parent=1 // pred_check
      _
    $region23: #{tpu_custom_call.1} parent=1 // pred_check_branch
      %60 = sbr.rel (0) target = $region25
    $region24: #{tpu_custom_call.1} parent=1 // pred_region
      %62 = vsyncadd [#allocation9], 0
      %s63 = sshll.u32 %s5, 4
      %s64 = int_to_ptr.hbm [resolvable:$true] %s63
      %s65 = sshll.u32 [#allocation8], 4
      %s66 = int_to_ptr.vmem [resolvable:$true] %s65
      %71 = dma.hbm_to_vmem [thread:$0]  %s64, 1024, %s66, [#allocation9], 64, 64, 4
    $region25: #{tpu_custom_call.1} parent=1 // pred_fallthru
      _
    // Predicated region
    $region26: #{tpu_custom_call.1} parent=1 // pred_check
      _
    $region27: #{tpu_custom_call.1} parent=1 // pred_check_branch
      %73 = sbr.rel (0) target = $region29
    $region28: #{tpu_custom_call.1} parent=1 // pred_region
      _
    $region29: #{tpu_custom_call.1} parent=1 // pred_fallthru
      _
    // Predicated region
    $region30: #{tpu_custom_call.1} parent=1 // pred_check
      _
    $region31: #{tpu_custom_call.1} parent=1 // pred_check_branch
      %75 = sbr.rel (0) target = $region33
    $region32: #{tpu_custom_call.1} parent=1 // pred_region
      %77 = dma.done [#allocation3], 128
    $region33: #{tpu_custom_call.1} parent=1 // pred_fallthru
      _
    // Predicated region
    $region34: #{tpu_custom_call.1} parent=1 // pred_check
      _
    $region35: #{tpu_custom_call.1} parent=1 // pred_check_branch
      %79 = sbr.rel (0) target = $region37
    $region36: #{tpu_custom_call.1} parent=1 // pred_region
      %81 = dma.done [#allocation6], 128
    $region37: #{tpu_custom_call.1} parent=1 // pred_fallthru
      _
    // Predicated region
    $region38: #{tpu_custom_call.1} parent=1 // pred_check
      _
    $region39: #{tpu_custom_call.1} parent=1 // pred_check_branch
      %83 = sbr.rel (0) target = $region41
    $region40: #{tpu_custom_call.1} parent=1 // pred_region
      %85 = dma.done [#allocation6], 1024
    $region41: #{tpu_custom_call.1} parent=1 // pred_fallthru
      _
    // Predicated region
    $region42: #{tpu_custom_call.1} parent=1 // pred_check
      _
    $region43: #{tpu_custom_call.1} parent=1 // pred_check_branch
      %87 = sbr.rel (0) target = $region45
    $region44: #{tpu_custom_call.1} parent=1 // pred_region
      %89 = dma.done [#allocation9], 1024
    $region45: #{tpu_custom_call.1} parent=1 // pred_fallthru
      _
    %v91 = vld [vmem:[#allocation2] sm:$0xf]
    %v92 = vld [vmem:[#allocation2 + $0x4] sm:$0xf]
    %v93 = vld [vmem:[#allocation5] sm:$0xf]
    %v94 = vld [vmem:[#allocation5 + $0x4] sm:$0xf]
    %v95 = vld [vmem:[%s2] sm:$0x1]
    %v97 = vperm.slane %v95, 0
    %v101 = vunpack.c.l.b16 %v91
    %v102 = vunpack.c.l.b16 %v92
    %v103 = vpack.c.b16 %v102, %v101
    %v106 = vunpack.c.l.b16 %v93
    %v107 = vunpack.c.l.b16 %v94
    %v108 = vpack.c.b16 %v107, %v106
    %vm110 = vcmask 130048
    %v112 = vsel %vm110, %v103, 0
    %114 = vmatpush.bf16.msra.mxu0 0
    %115 = vmatpush.bf16.msra.mxu0 0
    %116 = vmatpush.bf16.msra.mxu0 0
    %117 = vmatpush.bf16.msra.mxu0 0
    %118 = vmatpush.bf16.msra.mxu0 0
    %119 = vmatpush.bf16.msra.mxu0 0
    %120 = vmatpush.bf16.msra.mxu0 0
    %121 = vmatpush.bf16.msra.mxu0 %v108
    %122 = vmatmul.bf16.gmra.mxu0 %v112
    %v123 = vpop.f32.mrf.mxu0
    %v124 = vadd.f32 %v97, %v123
    %v125 = vpop.f32.mrf.mxu0
    %v126 = vadd.f32 %v97, %v125
    %127 = vdwg.mxu0
    %v128 = vmax.f32 %v124, 0.0
    %v129 = vmax.f32 %v126, 0.0
    %v130 = vpack.c.bf16 %v129, %v128
    %v131 = vld [vmem:[#allocation7] sm:$0xf]
    %v132 = vld [vmem:[#allocation7 + $0x4] sm:$0xf]
    %v133 = vld [vmem:[#allocation7 + $0x8] sm:$0xf]
    %v134 = vld [vmem:[#allocation7 + $0xc] sm:$0xf]
    %v135 = vld [vmem:[#allocation7 + $0x10] sm:$0xf]
    %v136 = vld [vmem:[#allocation7 + $0x14] sm:$0xf]
    %v137 = vld [vmem:[#allocation7 + $0x18] sm:$0xf]
    %v138 = vld [vmem:[#allocation7 + $0x1c] sm:$0xf]
    %v139 = vld [vmem:[#allocation7 + $0x20] sm:$0xf]
    %v140 = vld [vmem:[#allocation7 + $0x24] sm:$0xf]
    %v141 = vld [vmem:[#allocation7 + $0x28] sm:$0xf]
    %v142 = vld [vmem:[#allocation7 + $0x2c] sm:$0xf]
    %v143 = vld [vmem:[#allocation7 + $0x30] sm:$0xf]
    %v144 = vld [vmem:[#allocation7 + $0x34] sm:$0xf]
    %v145 = vld [vmem:[#allocation7 + $0x38] sm:$0xf]
    %v146 = vld [vmem:[#allocation7 + $0x3c] sm:$0xf]
    %v147 = vld [vmem:[%s4] sm:$0x1]
    %v149 = vperm.slane %v147, 0
    %v167 = vunpack.c.l.b16 %v131
    %v168 = vunpack.c.l.b16 %v132
    %v169 = vunpack.c.l.b16 %v133
    %v170 = vunpack.c.l.b16 %v134
    %v171 = vunpack.c.l.b16 %v135
    %v172 = vunpack.c.l.b16 %v136
    %v173 = vunpack.c.l.b16 %v137
    %v174 = vunpack.c.l.b16 %v138
    %v175 = vunpack.c.l.b16 %v139
    %v176 = vunpack.c.l.b16 %v140
    %v177 = vunpack.c.l.b16 %v141
    %v178 = vunpack.c.l.b16 %v142
    %v179 = vunpack.c.l.b16 %v143
    %v180 = vunpack.c.l.b16 %v144
    %v181 = vunpack.c.l.b16 %v145
    %v182 = vunpack.c.l.b16 %v146
    %v183 = vpack.c.b16 %v168, %v167
    %v184 = vpack.c.b16 %v170, %v169
    %v185 = vpack.c.b16 %v172, %v171
    %v186 = vpack.c.b16 %v174, %v173
    %v187 = vpack.c.b16 %v176, %v175
    %v188 = vpack.c.b16 %v178, %v177
    %v189 = vpack.c.b16 %v180, %v179
    %v190 = vpack.c.b16 %v182, %v181
    %199 = vmatpush.bf16.msra.mxu0 %v190
    %200 = vmatpush.bf16.msra.mxu0 %v189
    %201 = vmatpush.bf16.msra.mxu0 %v188
    %202 = vmatpush.bf16.msra.mxu0 %v187
    %203 = vmatpush.bf16.msra.mxu0 %v186
    %204 = vmatpush.bf16.msra.mxu0 %v185
    %205 = vmatpush.bf16.msra.mxu0 %v184
    %206 = vmatpush.bf16.msra.mxu0 %v183
    %207 = vmatmul.bf16.gmra.mxu0 %v130
    %v208 = vpop.f32.mrf.mxu0
    %v209 = vadd.f32 %v149, %v208
    %v210 = vpop.f32.mrf.mxu0
    %v211 = vadd.f32 %v149, %v210
    %212 = vdwg.mxu0
    %v213 = vmax.f32 %v209, 0.0
    %v214 = vmax.f32 %v211, 0.0
    %v215 = vpack.c.bf16 %v214, %v213
    %v216 = vld [vmem:[#allocation8] sm:$0xf]
    %v217 = vld [vmem:[#allocation8 + $0x4] sm:$0xf]
    %v218 = vld [vmem:[#allocation8 + $0x8] sm:$0xf]
    %v219 = vld [vmem:[#allocation8 + $0xc] sm:$0xf]
    %v220 = vld [vmem:[#allocation8 + $0x10] sm:$0xf]
    %v221 = vld [vmem:[#allocation8 + $0x14] sm:$0xf]
    %v222 = vld [vmem:[#allocation8 + $0x18] sm:$0xf]
    %v223 = vld [vmem:[#allocation8 + $0x1c] sm:$0xf]
    %v224 = vld [vmem:[#allocation8 + $0x20] sm:$0xf]
    %v225 = vld [vmem:[#allocation8 + $0x24] sm:$0xf]
    %v226 = vld [vmem:[#allocation8 + $0x28] sm:$0xf]
    %v227 = vld [vmem:[#allocation8 + $0x2c] sm:$0xf]
    %v228 = vld [vmem:[#allocation8 + $0x30] sm:$0xf]
    %v229 = vld [vmem:[#allocation8 + $0x34] sm:$0xf]
    %v230 = vld [vmem:[#allocation8 + $0x38] sm:$0xf]
    %v231 = vld [vmem:[#allocation8 + $0x3c] sm:$0xf]
    %v232 = vld [vmem:[%s6] sm:$0x1]
    %v234 = vperm.slane %v232, 0
    %v252 = vunpack.c.l.b16 %v216
    %v253 = vunpack.c.l.b16 %v217
    %v254 = vunpack.c.l.b16 %v218
    %v255 = vunpack.c.l.b16 %v219
    %v256 = vunpack.c.l.b16 %v220
    %v257 = vunpack.c.l.b16 %v221
    %v258 = vunpack.c.l.b16 %v222
    %v259 = vunpack.c.l.b16 %v223
    %v260 = vunpack.c.l.b16 %v224
    %v261 = vunpack.c.l.b16 %v225
    %v262 = vunpack.c.l.b16 %v226
    %v263 = vunpack.c.l.b16 %v227
    %v264 = vunpack.c.l.b16 %v228
    %v265 = vunpack.c.l.b16 %v229
    %v266 = vunpack.c.l.b16 %v230
    %v267 = vunpack.c.l.b16 %v231
    %v268 = vpack.c.b16 %v253, %v252
    %v269 = vpack.c.b16 %v255, %v254
    %v270 = vpack.c.b16 %v257, %v256
    %v271 = vpack.c.b16 %v259, %v258
    %v272 = vpack.c.b16 %v261, %v260
    %v273 = vpack.c.b16 %v263, %v262
    %v274 = vpack.c.b16 %v265, %v264
    %v275 = vpack.c.b16 %v267, %v266
    %284 = vmatpush.bf16.msra.mxu0 %v275
    %285 = vmatpush.bf16.msra.mxu0 %v274
    %286 = vmatpush.bf16.msra.mxu0 %v273
    %287 = vmatpush.bf16.msra.mxu0 %v272
    %288 = vmatpush.bf16.msra.mxu0 %v271
    %289 = vmatpush.bf16.msra.mxu0 %v270
    %290 = vmatpush.bf16.msra.mxu0 %v269
    %291 = vmatpush.bf16.msra.mxu0 %v268
    %292 = vmatmul.bf16.gmra.mxu0 %v215
    %v293 = vpop.f32.mrf.mxu0
    %v294 = vadd.f32 %v234, %v293
    %v295 = vpop.f32.mrf.mxu0
    %v296 = vadd.f32 %v234, %v295
    %297 = vdwg.mxu0
    %v298 = vpack.c.bf16 %v294, %v294
    %v299 = vpack.c.bf16 %v296, %v296
    %300 = vst [vmem:[#allocation10] sm:$0xf] %v298
    %301 = vst [vmem:[#allocation10 + $0x4] sm:$0xf] %v299
    // Predicated region
    $region46: #{tpu_custom_call.1} parent=1 // pred_check
      _
    $region47: #{tpu_custom_call.1} parent=1 // pred_check_branch
      %303 = sbr.rel (0) target = $region49
    $region48: #{tpu_custom_call.1} parent=1 // pred_region
      %305 = vsyncadd [#allocation4], 0
      %s306 = sshll.u32 [#allocation10], 4
      %s307 = int_to_ptr.vmem [resolvable:$true] %s306
      %s308 = sshll.u32 %s7, 4
      %s309 = int_to_ptr.hbm [resolvable:$true] %s308
      %314 = dma.vmem_to_hbm [thread:$0]  %s307, 128, %s309, [#allocation4], 64, 64, 4
    $region49: #{tpu_custom_call.1} parent=1 // pred_fallthru
      _
    // Predicated region
    $region50: #{tpu_custom_call.1} parent=1 // pred_check
      _
    $region51: #{tpu_custom_call.1} parent=1 // pred_check_branch
      %316 = sbr.rel (0) target = $region53
    $region52: #{tpu_custom_call.1} parent=1 // pred_region
      %318 = dma.done [#allocation4], 128
    $region53: #{tpu_custom_call.1} parent=1 // pred_fallthru
      _
    %319 = vsyncpa [#allocation3], 1
    %320 = vsyncpa [#allocation6], 1
    %321 = vsyncpa [#allocation9], 1
    %322 = vsyncpa [#allocation4], 1

</llo_original>
